<compile_context>
chip_gen: v6e
topology: v6e:2x2x1
jax: 0.10.0
libtpu: 0.0.40
codegen_flags: <defaults>
</compile_context>

<pallas_src>
import functools

import jax
import jax.numpy as jnp
from jax.experimental import pallas as pl
from jax.experimental.pallas import tpu as pltpu

_LANE = 128
_SUBLANE = 8


def _round_up(n, m):
    return ((n + m - 1) // m) * m


def _fae_kernel(x_ref, w1_ref, w_ref, out_ref, *, bottleneck):
    """Fused forward pass.

    x_ref:   (bb, Fin)    narrow batch tile; col `input_size` == 1.0 (bias lane)
    w1_ref:  (Fin, F)     bias-augmented first Linear (propagates the ones lane)
    w_ref:   (6, F, F)    resident slabs:
                 [0] w2_aug  [1] w3_aug  [2] w4_aug  [3] w5_aug
                 [4] w6_aug @ blockdiag(basis_eval_t)   (fused, no bias lane out)
                 [5] post-relu weighted selector -> output cols [bottleneck, bottleneck+P)
    out_ref: (bb, F)      cols [0, bottleneck) = encoded, [bottleneck, bottleneck+P) = output
    """
    f32 = jnp.float32
    cdt = w_ref.dtype  # matmul operand dtype (bf16 by default, f32 optional)

    # ---------------- encoder ----------------
    h = jnp.dot(x_ref[...].astype(cdt), w1_ref[...], preferred_element_type=f32)
    h = jnp.maximum(h, 0.0)
    h = jnp.maximum(jnp.dot(h.astype(cdt), w_ref[0], preferred_element_type=f32), 0.0)
    enc = jnp.dot(h.astype(cdt), w_ref[1], preferred_element_type=f32)

    # ---------------- decoder ----------------
    h = jnp.maximum(jnp.dot(enc.astype(cdt), w_ref[2], preferred_element_type=f32), 0.0)
    h = jnp.maximum(jnp.dot(h.astype(cdt), w_ref[3], preferred_element_type=f32), 0.0)

    # ---- fused (final Linear @ block-diag basis), relu, weighted selector ----
    bo = jnp.maximum(jnp.dot(h.astype(cdt), w_ref[4], preferred_element_type=f32), 0.0)
    out = jnp.dot(bo.astype(cdt), w_ref[5], preferred_element_type=f32)

    # Merge encoded into lanes [0, bottleneck) of the single output slab
    # (selector columns [0, bottleneck) are identically zero, so a lane-masked add
    # is exact and keeps the store full-lane / unmasked).
    lane = jax.lax.broadcasted_iota(jnp.int32, out.shape, 1)
    out_ref[...] = (out + jnp.where(lane < bottleneck, enc, 0.0)).astype(out_ref.dtype)


def pack_params(params, basis_eval_t, weights, *, basis_dim, input_size,
                param_dtype=jnp.bfloat16):
    """Build the (Fin, F) first-layer slab and the (6, F, F) resident stack.

    Pure layout plumbing (runs once, outside the kernel).
    """
    P = basis_eval_t.shape[1]
    bottleneck = params["w3"].shape[1]
    widths = [params["w1"].shape[1], params["w2"].shape[1], bottleneck,
              params["w4"].shape[1], params["w5"].shape[1],
              basis_dim * input_size, basis_dim * P, bottleneck + P]
    F = _round_up(max(widths) + 1, _LANE)        # +1 lane reserved for the ones/bias lane
    Fin = _round_up(input_size + 1, _SUBLANE)    # narrow input width (x cols + ones lane)

    def aug(w, b):
        # y = x @ W + b folded into one matmul via the constant-ones lane at F-1.
        w = jnp.asarray(w, jnp.float32)
        b = jnp.asarray(b, jnp.float32).reshape(-1)
        blk = jnp.zeros((F, F), jnp.float32)
        blk = blk.at[: w.shape[0], : w.shape[1]].set(w)
        blk = blk.at[F - 1, : w.shape[1]].set(b)
        blk = blk.at[F - 1, F - 1].set(1.0)      # propagate the 1.0 to the next layer
        return blk

    # First layer: narrow slab, bias/ones row at index `input_size`.
    w1 = jnp.asarray(params["w1"], jnp.float32)
    b1 = jnp.asarray(params["b1"], jnp.float32).reshape(-1)
    w1s = jnp.zeros((Fin, F), jnp.float32)
    w1s = w1s.at[:input_size, : w1.shape[1]].set(w1)
    w1s = w1s.at[input_size, : w1.shape[1]].set(b1)
    w1s = w1s.at[input_size, F - 1].set(1.0)

    # Block-diagonal basis: column block d = (chunk d of decoded) @ basis_eval_t.
    bd = jnp.zeros((F, F), jnp.float32)
    be = jnp.asarray(basis_eval_t, jnp.float32)
    for d in range(basis_dim):
        bd = bd.at[d * input_size:(d + 1) * input_size, d * P:(d + 1) * P].set(be)

    # Fuse final decoder Linear with the basis (no nonlinearity in between; the bias
    # row transforms correctly through bd, and bd's bias row/column are zero).
    fused = aug(params["w6"], params["b6"]) @ bd

    # Post-relu weighted selector; output columns shifted to [bottleneck, bottleneck+P)
    # so encoded + output share one lane-dense slab.
    wvec = jnp.asarray(weights, jnp.float32).reshape(-1)
    sel = jnp.zeros((F, F), jnp.float32)
    eye_p = jnp.eye(P, dtype=jnp.float32)
    for d in range(basis_dim):
        sel = sel.at[d * P:(d + 1) * P, bottleneck:bottleneck + P].set(wvec[d] * eye_p)

    stack = jnp.stack([
        aug(params["w2"], params["b2"]),
        aug(params["w3"], params["b3"]),
        aug(params["w4"], params["b4"]),
        aug(params["w5"], params["b5"]),
        fused, sel,
    ]).astype(param_dtype)
    return w1s.astype(param_dtype), stack, F, Fin


def functional_autoencoder_forward(x, params, basis_eval_t, weights, *,
                                   basis_dim, input_size, block_b=512,
                                   param_dtype=jnp.bfloat16, slice_outputs=True):
    """Full forward pass in one Pallas kernel.

    x:            (B, input_size) float32
    params:       dict of (in, out) weights + (1, out) biases for the 6 Linears
                  (pre-transposed vs. torch's (out, in) storage)
    basis_eval_t: (input_size, P) float32   (module stores basis_eval transposed)
    weights:      (basis_dim, 1)  float32   (module's self.weights)
    returns:      output (B, P), encoded (B, bottleneck)    [or the padded slab]
    """
    B = x.shape[0]
    P = basis_eval_t.shape[1]
    bottleneck = params["w3"].shape[1]

    w1s, w_stack, F, Fin = pack_params(params, basis_eval_t, weights,
                                       basis_dim=basis_dim, input_size=input_size,
                                       param_dtype=param_dtype)

    # ---- batch tiling: big tiles, but >=2 grid steps for mid-size batches so the
    # "parallel" axis can shard across both TensorCores on v7x. ----
    Bp8 = _round_up(B, _SUBLANE)
    if Bp8 <= 256:
        bb = Bp8
    elif Bp8 <= 2 * block_b:
        bb = _round_up((Bp8 + 1) // 2, _SUBLANE)
    else:
        bb = block_b

    # ---- VMEM-footprint guard (v7x: 64 MiB VMEM, ~32 MiB scoped default). ----
    pbytes = jnp.dtype(param_dtype).itemsize
    def _footprint(bbt):
        wgt = 2 * (Fin * F + 6 * F * F) * pbytes        # double-buffered resident weights
        io = 2 * (bbt * Fin * 4 + bbt * F * 4)          # double-buffered x / out tiles
        act = 4 * bbt * F * 4                           # live f32 activation slabs
        return wgt + io + act
    while _footprint(bb) > 24 * (1 << 20) and bb > _SUBLANE:
        bb = max(_SUBLANE, _round_up(bb // 2, _SUBLANE))

    Bp = _round_up(Bp8, bb)

    # Narrow padded input: live columns + ones lane (pad rows keep the ones lane 0,
    # so padded rows stay exactly zero through every layer — no bias-propagated junk).
    x_aug = jnp.zeros((Bp, Fin), jnp.float32)
    x_aug = x_aug.at[:B, :input_size].set(x.astype(jnp.float32))
    x_aug = x_aug.at[:B, input_size].set(1.0)

    grid = (Bp // bb,)
    kernel = functools.partial(_fae_kernel, bottleneck=bottleneck)
    out_pad = pl.pallas_call(
        kernel,
        out_shape=jax.ShapeDtypeStruct((Bp, F), jnp.float32),
        grid=grid,
        in_specs=[
            pl.BlockSpec((bb, Fin), lambda i: (i, 0)),      # narrow batch tile
            pl.BlockSpec((Fin, F), lambda i: (0, 0)),       # resident first-layer slab
            pl.BlockSpec((6, F, F), lambda i: (0, 0, 0)),   # resident param stack
        ],
        out_specs=pl.BlockSpec((bb, F), lambda i: (i, 0)),
        compiler_params=pltpu.CompilerParams(
            dimension_semantics=("parallel",)),
    )(x_aug, w1s, w_stack)

    if not slice_outputs:
        # Caller consumes the padded slab directly (skips the re-read/copy slices).
        return out_pad, (B, bottleneck, P)
    return out_pad[:B, bottleneck:bottleneck + P], out_pad[:B, :bottleneck]


def _reference_forward(x, params, basis_eval_t, weights, *, basis_dim, input_size):
    """Pure-JAX reference mirroring the PyTorch forward (eval mode)."""
    def lin(h, w, b):
        return h @ w + b.reshape(1, -1)
    h = jax.nn.relu(lin(x, params["w1"], params["b1"]))
    h = jax.nn.relu(lin(h, params["w2"], params["b2"]))
    enc = lin(h, params["w3"], params["b3"])
    d = jax.nn.relu(lin(enc, params["w4"], params["b4"]))
    d = jax.nn.relu(lin(d, params["w5"], params["b5"]))
    dec = lin(d, params["w6"], params["b6"])
    dec = dec.reshape(-1, basis_dim, input_size)
    basis_output = jnp.matmul(dec, basis_eval_t)                     # (B, basis_dim, P)
    basis_act = jax.nn.relu(basis_output)
    out = jnp.sum(basis_act * jnp.asarray(weights).reshape(1, basis_dim, 1), axis=1)
    return out, enc


if __name__ == "__main__":
    # Small, module-consistent shapes.
    B = 8
    input_size = 16
    hidden1 = 32
    hidden2 = 24
    bottleneck = 8
    basis_dim = 4
    n_points = 16          # rows of the original basis_eval matrix

    key = jax.random.PRNGKey(0)
    ks = jax.random.split(key, 16)

    def init_linear(kw, kb, fan_in, fan_out):
        # Stored as (in, out) so the kernel computes y = x @ W + b.
        w = jax.random.normal(kw, (fan_in, fan_out), jnp.float32) * 0.1
        b = jax.random.normal(kb, (1, fan_out), jnp.float32) * 0.01
        return w, b

    params = {}
    params["w1"], params["b1"] = init_linear(ks[0], ks[1], input_size, hidden1)
    params["w2"], params["b2"] = init_linear(ks[2], ks[3], hidden1, hidden2)
    params["w3"], params["b3"] = init_linear(ks[4], ks[5], hidden2, bottleneck)
    params["w4"], params["b4"] = init_linear(ks[6], ks[7], bottleneck, hidden2)
    params["w5"], params["b5"] = init_linear(ks[8], ks[9], hidden2, hidden1)
    params["w6"], params["b6"] = init_linear(ks[10], ks[11], hidden1,
                                             input_size * basis_dim)

    # Original basis_eval has shape (n_points, input_size); the module stores
    # its transpose, shape (input_size, n_points).
    basis_eval = jax.random.normal(ks[12], (n_points, input_size), jnp.float32)
    basis_eval_t = basis_eval.T

    # Module inits self.weights to zeros ((basis_dim, 1)); use small random
    # values so the output is non-trivial for verification.
    weights = jax.random.normal(ks[13], (basis_dim, 1), jnp.float32) * 0.5

    x = jax.random.normal(ks[14], (B, input_size), jnp.float32)

    ref_out, ref_enc = _reference_forward(
        x, params, basis_eval_t, weights,
        basis_dim=basis_dim, input_size=input_size)

    # --- f32 path: bit-for-bit-ish check of the fused structure ---
    out32, enc32 = functional_autoencoder_forward(
        x, params, basis_eval_t, weights,
        basis_dim=basis_dim, input_size=input_size, param_dtype=jnp.float32)
    jax.block_until_ready((out32, enc32))
    assert out32.shape == (B, n_points) and enc32.shape == (B, bottleneck)
    assert jnp.allclose(out32, ref_out, atol=1e-4, rtol=1e-3)
    assert jnp.allclose(enc32, ref_enc, atol=1e-4, rtol=1e-3)

    # --- default bf16 path: fast path on all TPU generations ---
    out, enc = functional_autoencoder_forward(
        x, params, basis_eval_t, weights,
        basis_dim=basis_dim, input_size=input_size)   # param_dtype=bf16
    jax.block_until_ready((out, enc))
    assert out.shape == (B, n_points) and enc.shape == (B, bottleneck)
    assert jnp.allclose(out, ref_out, atol=2e-2, rtol=5e-2)
    assert jnp.allclose(enc, ref_enc, atol=2e-2, rtol=5e-2)

    print("KERNEL_OK")
</pallas_src>

<mosaic_0001>
module attributes {stable_mosaic.version = 11 : i64} {
  func.func @_fae_kernel(%arg0: i32, %arg1: memref<8x24xf32, #tpu.memory_space<vmem>>, %arg2: memref<24x128xf32, #tpu.memory_space<vmem>>, %arg3: memref<6x128x128xf32, #tpu.memory_space<vmem>>, %arg4: memref<8x128xf32, #tpu.memory_space<vmem>>) attributes {dimension_semantics = [#tpu.dimension_semantics<parallel>], iteration_bounds = array<i64: 1>, scalar_prefetch = 0 : i64, scratch_operands = 0 : i64, tpu.core_type = #tpu.core_type<tc>, window_params = [{transform_indices = @transform_0, window_bounds = array<i64: 8, 24>}, {pipeline_mode = #tpu.pipeline_mode<synchronous>, transform_indices = @transform_1, window_bounds = array<i64: 24, 128>}, {pipeline_mode = #tpu.pipeline_mode<synchronous>, transform_indices = @transform_2, window_bounds = array<i64: 6, 128, 128>}, {transform_indices = @transform_3, window_bounds = array<i64: 8, 128>}]} {
    %c0 = arith.constant 0 : index
    %c0_0 = arith.constant 0 : index
    %0 = vector.load %arg1[%c0, %c0_0] : memref<8x24xf32, #tpu.memory_space<vmem>>, vector<8x24xf32>
    %c0_1 = arith.constant 0 : index
    %c0_2 = arith.constant 0 : index
    %1 = vector.load %arg2[%c0_1, %c0_2] : memref<24x128xf32, #tpu.memory_space<vmem>>, vector<24x128xf32>
    %cst = arith.constant dense<0.000000e+00> : vector<8x128xf32>
    %2 = tpu.matmul %0, %1, %cst {dimension_numbers = #tpu.dot_dimension_numbers<[1], [0], [0], [1], [0, 0, 1, 1], [], []>} : vector<8x24xf32>, vector<24x128xf32>, vector<8x128xf32> -> vector<8x128xf32>
    %cst_3 = arith.constant 0.000000e+00 : f32
    %3 = vector.broadcast %cst_3 : f32 to vector<8x128xf32>
    %4 = arith.maximumf %2, %3 : vector<8x128xf32>
    %c0_4 = arith.constant 0 : index
    %c0_5 = arith.constant 0 : index
    %c0_6 = arith.constant 0 : index
    %5 = vector.load %arg3[%c0_4, %c0_5, %c0_6] : memref<6x128x128xf32, #tpu.memory_space<vmem>>, vector<1x128x128xf32>
    %6 = vector.shape_cast %5 : vector<1x128x128xf32> to vector<128x128xf32>
    %cst_7 = arith.constant dense<0.000000e+00> : vector<8x128xf32>
    %7 = tpu.matmul %4, %6, %cst_7 {dimension_numbers = #tpu.dot_dimension_numbers<[1], [0], [0], [1], [0, 0, 1, 1], [], []>} : vector<8x128xf32>, vector<128x128xf32>, vector<8x128xf32> -> vector<8x128xf32>
    %cst_8 = arith.constant 0.000000e+00 : f32
    %8 = vector.broadcast %cst_8 : f32 to vector<8x128xf32>
    %9 = arith.maximumf %7, %8 : vector<8x128xf32>
    %c1 = arith.constant 1 : index
    %c0_9 = arith.constant 0 : index
    %c0_10 = arith.constant 0 : index
    %10 = vector.load %arg3[%c1, %c0_9, %c0_10] : memref<6x128x128xf32, #tpu.memory_space<vmem>>, vector<1x128x128xf32>
    %11 = vector.shape_cast %10 : vector<1x128x128xf32> to vector<128x128xf32>
    %cst_11 = arith.constant dense<0.000000e+00> : vector<8x128xf32>
    %12 = tpu.matmul %9, %11, %cst_11 {dimension_numbers = #tpu.dot_dimension_numbers<[1], [0], [0], [1], [0, 0, 1, 1], [], []>} : vector<8x128xf32>, vector<128x128xf32>, vector<8x128xf32> -> vector<8x128xf32>
    %c2 = arith.constant 2 : index
    %c0_12 = arith.constant 0 : index
    %c0_13 = arith.constant 0 : index
    %13 = vector.load %arg3[%c2, %c0_12, %c0_13] : memref<6x128x128xf32, #tpu.memory_space<vmem>>, vector<1x128x128xf32>
    %14 = vector.shape_cast %13 : vector<1x128x128xf32> to vector<128x128xf32>
    %cst_14 = arith.constant dense<0.000000e+00> : vector<8x128xf32>
    %15 = tpu.matmul %12, %14, %cst_14 {dimension_numbers = #tpu.dot_dimension_numbers<[1], [0], [0], [1], [0, 0, 1, 1], [], []>} : vector<8x128xf32>, vector<128x128xf32>, vector<8x128xf32> -> vector<8x128xf32>
    %cst_15 = arith.constant 0.000000e+00 : f32
    %16 = vector.broadcast %cst_15 : f32 to vector<8x128xf32>
    %17 = arith.maximumf %15, %16 : vector<8x128xf32>
    %c3 = arith.constant 3 : index
    %c0_16 = arith.constant 0 : index
    %c0_17 = arith.constant 0 : index
    %18 = vector.load %arg3[%c3, %c0_16, %c0_17] : memref<6x128x128xf32, #tpu.memory_space<vmem>>, vector<1x128x128xf32>
    %19 = vector.shape_cast %18 : vector<1x128x128xf32> to vector<128x128xf32>
    %cst_18 = arith.constant dense<0.000000e+00> : vector<8x128xf32>
    %20 = tpu.matmul %17, %19, %cst_18 {dimension_numbers = #tpu.dot_dimension_numbers<[1], [0], [0], [1], [0, 0, 1, 1], [], []>} : vector<8x128xf32>, vector<128x128xf32>, vector<8x128xf32> -> vector<8x128xf32>
    %cst_19 = arith.constant 0.000000e+00 : f32
    %21 = vector.broadcast %cst_19 : f32 to vector<8x128xf32>
    %22 = arith.maximumf %20, %21 : vector<8x128xf32>
    %c4 = arith.constant 4 : index
    %c0_20 = arith.constant 0 : index
    %c0_21 = arith.constant 0 : index
    %23 = vector.load %arg3[%c4, %c0_20, %c0_21] : memref<6x128x128xf32, #tpu.memory_space<vmem>>, vector<1x128x128xf32>
    %24 = vector.shape_cast %23 : vector<1x128x128xf32> to vector<128x128xf32>
    %cst_22 = arith.constant dense<0.000000e+00> : vector<8x128xf32>
    %25 = tpu.matmul %22, %24, %cst_22 {dimension_numbers = #tpu.dot_dimension_numbers<[1], [0], [0], [1], [0, 0, 1, 1], [], []>} : vector<8x128xf32>, vector<128x128xf32>, vector<8x128xf32> -> vector<8x128xf32>
    %cst_23 = arith.constant 0.000000e+00 : f32
    %26 = vector.broadcast %cst_23 : f32 to vector<8x128xf32>
    %27 = arith.maximumf %25, %26 : vector<8x128xf32>
    %c5 = arith.constant 5 : index
    %c0_24 = arith.constant 0 : index
    %c0_25 = arith.constant 0 : index
    %28 = vector.load %arg3[%c5, %c0_24, %c0_25] : memref<6x128x128xf32, #tpu.memory_space<vmem>>, vector<1x128x128xf32>
    %29 = vector.shape_cast %28 : vector<1x128x128xf32> to vector<128x128xf32>
    %cst_26 = arith.constant dense<0.000000e+00> : vector<8x128xf32>
    %30 = tpu.matmul %27, %29, %cst_26 {dimension_numbers = #tpu.dot_dimension_numbers<[1], [0], [0], [1], [0, 0, 1, 1], [], []>} : vector<8x128xf32>, vector<128x128xf32>, vector<8x128xf32> -> vector<8x128xf32>
    %31 = tpu.iota {dimensions = array<i32: 1>} : vector<8x128xi32>
    %c8_i32 = arith.constant 8 : i32
    %32 = vector.broadcast %c8_i32 : i32 to vector<8x128xi32>
    %33 = arith.cmpi slt, %31, %32 : vector<8x128xi32>
    %cst_27 = arith.constant 0.000000e+00 : f32
    %34 = vector.broadcast %cst_27 : f32 to vector<8x128xf32>
    %35 = arith.select %33, %12, %34 : vector<8x128xi1>, vector<8x128xf32>
    %36 = arith.addf %30, %35 : vector<8x128xf32>
    %c0_28 = arith.constant 0 : index
    %c0_29 = arith.constant 0 : index
    %37 = vector.load %arg4[%c0_28, %c0_29] : memref<8x128xf32, #tpu.memory_space<vmem>>, vector<8x128xf32>
    tpu.vector_store %arg4[%c0_28, %c0_29], %36 {strides = array<i32>} : memref<8x128xf32, #tpu.memory_space<vmem>>, vector<8x128xf32>,
    return
  }
  func.func @transform_0(%arg0: i32) -> (i32, i32) {
    %c0_i32 = arith.constant 0 : i32
    %c0_i32_0 = arith.constant 0 : i32
    return %arg0, %c0_i32 : i32, i32
  }
  func.func @transform_1(%arg0: i32) -> (i32, i32) {
    %c0_i32 = arith.constant 0 : i32
    %c0_i32_0 = arith.constant 0 : i32
    %c0_i32_1 = arith.constant 0 : i32
    return %c0_i32, %c0_i32_0 : i32, i32
  }
  func.func @transform_2(%arg0: i32) -> (i32, i32, i32) {
    %c0_i32 = arith.constant 0 : i32
    %c0_i32_0 = arith.constant 0 : i32
    %c0_i32_1 = arith.constant 0 : i32
    %c0_i32_2 = arith.constant 0 : i32
    return %c0_i32, %c0_i32_0, %c0_i32_1 : i32, i32, i32
  }
  func.func @transform_3(%arg0: i32) -> (i32, i32) {
    %c0_i32 = arith.constant 0 : i32
    %c0_i32_0 = arith.constant 0 : i32
    return %arg0, %c0_i32 : i32, i32
  }
}

</mosaic_0001>

<llo_original>
// kernel: tpu_custom_call.1
$region0: #{tpu_custom_call.1}
  #allocation0 [shape = 'u32[]', space=smem, size = 0x4, offset = 0x4, fixed_abs, tag = 'smem constant byte address 0x4 - core index']
  #allocation1 [shape = 'u32[144,128]{1,0:T(1,128)}', space=vmem, size = 0x12000, scoped, tag = 'internal scratch']
  %s0 = inlined_call_operand.hbm [shape: f32[8,24], index: 0, kind: input, shape index: {}]
  %s1 = inlined_call_operand.hbm [shape: f32[24,128], index: 1, kind: input, shape index: {}]
  %s2 = inlined_call_operand.hbm [shape: f32[6,128,128], index: 2, kind: input, shape index: {}]
  %s3 = inlined_call_operand.hbm [shape: f32[8,128], index: 3, kind: output, shape index: {}]
  %s4 = sld [smem:[#allocation0]]
  $region34: #{tpu_custom_call.1} parent=0
    _
  %s6 = ssub.s32 1, %s4
  %s7 = scalar_select 0, %s6, %s4
  $region1: #{tpu_custom_call.1} parent=0
    #allocation2 [shape = 'u8[4096]{0}', space=vmem, size = 0x1000, scoped, tag = 'input window, operand 0, single buffered']
    #allocation3 [shape = 's32[1]{0}', space=sflag, size = 0x4, scoped, tag = 'scoped memory for tpu_custom_call.1']
    #allocation4 [shape = 's32[1]{0}', space=sflag, size = 0x4, scoped, tag = 'scoped memory for tpu_custom_call.1']
    #allocation5 [shape = 'u8[12288]{0}', space=vmem, size = 0x3000, scoped, tag = 'input window, operand 1, single buffered']
    #allocation6 [shape = 's32[1]{0}', space=sflag, size = 0x4, scoped, tag = 'scoped memory for tpu_custom_call.1']
    #allocation7 [shape = 'u8[393216]{0}', space=vmem, size = 0x60000, scoped, tag = 'input window, operand 2, single buffered']
    #allocation8 [shape = 'u8[4096]{0}', space=vmem, size = 0x1000, scoped, tag = 'output window, operand 0, single buffered']
    %8 = vsyncpa [#allocation3], 0
    %9 = vsyncpa [#allocation6], 0
    %10 = vsyncpa [#allocation4], 0
    // Predicated region
    $region2: #{tpu_custom_call.1} parent=1 // pred_check
      _
    $region3: #{tpu_custom_call.1} parent=1 // pred_check_branch
      %12 = sbr.rel (0) target = $region5
    $region4: #{tpu_custom_call.1} parent=1 // pred_region
      %s14 = ssub.s32 128, 128
      %15 = vsyncadd [#allocation3], %s14
      %s17 = sshll.u32 [#allocation2], 4
      %s18 = int_to_ptr.vmem [resolvable:$true] %s17
      %20 = dma.hbm_to_vmem [thread:$0]  %s0, 128, %s18, [#allocation3]
    $region5: #{tpu_custom_call.1} parent=1 // pred_fallthru
      _
    // Predicated region
    $region6: #{tpu_custom_call.1} parent=1 // pred_check
      _
    $region7: #{tpu_custom_call.1} parent=1 // pred_check_branch
      %22 = sbr.rel (0) target = $region9
    $region8: #{tpu_custom_call.1} parent=1 // pred_region
      %s24 = ssub.s32 384, 384
      %25 = vsyncadd [#allocation6], %s24
      %s26 = sshll.u32 [#allocation5], 4
      %s27 = int_to_ptr.vmem [resolvable:$true] %s26
      %32 = dma.hbm_to_vmem [thread:$0]  %s1, 384, %s27, [#allocation6], 128, 128, 8
    $region9: #{tpu_custom_call.1} parent=1 // pred_fallthru
      _
    // Predicated region
    $region10: #{tpu_custom_call.1} parent=1 // pred_check
      _
    $region11: #{tpu_custom_call.1} parent=1 // pred_check_branch
      %34 = sbr.rel (0) target = $region13
    $region12: #{tpu_custom_call.1} parent=1 // pred_region
      %s36 = ssub.s32 12288, 12288
      %37 = vsyncadd [#allocation6], %s36
      %s38 = sshll.u32 [#allocation7], 4
      %s39 = int_to_ptr.vmem [resolvable:$true] %s38
      %44 = dma.hbm_to_vmem [thread:$0]  %s2, 12288, %s39, [#allocation6], 128, 128, 8
    $region13: #{tpu_custom_call.1} parent=1 // pred_fallthru
      _
    // Predicated region
    $region14: #{tpu_custom_call.1} parent=1 // pred_check
      _
    $region15: #{tpu_custom_call.1} parent=1 // pred_check_branch
      %46 = sbr.rel (0) target = $region17
    $region16: #{tpu_custom_call.1} parent=1 // pred_region
      %47 = dma.done [#allocation3], 128
    $region17: #{tpu_custom_call.1} parent=1 // pred_fallthru
      _
    // Predicated region
    $region18: #{tpu_custom_call.1} parent=1 // pred_check
      _
    $region19: #{tpu_custom_call.1} parent=1 // pred_check_branch
      %49 = sbr.rel (0) target = $region21
    $region20: #{tpu_custom_call.1} parent=1 // pred_region
      %50 = dma.done [#allocation6], 384
    $region21: #{tpu_custom_call.1} parent=1 // pred_fallthru
      _
    // Predicated region
    $region22: #{tpu_custom_call.1} parent=1 // pred_check
      _
    $region23: #{tpu_custom_call.1} parent=1 // pred_check_branch
      %52 = sbr.rel (0) target = $region25
    $region24: #{tpu_custom_call.1} parent=1 // pred_region
      %53 = dma.done [#allocation6], 12288
    $region25: #{tpu_custom_call.1} parent=1 // pred_fallthru
      _
    %v54 = vld [vmem:[#allocation2] sm:$0xff]
    %v55 = vld [vmem:[#allocation5] sm:$0xff]
    %v56 = vld [vmem:[#allocation5 + $0x8] sm:$0xff]
    %v57 = vld [vmem:[#allocation5 + $0x10] sm:$0xff]
    %vm58 = vcmask 195584
    %v60 = vsel %vm58, %v54, 0
    %62 = vmatprep.subr.mxu0 0.0
    %63 = vmatpush1.msra.mxu0 0.0
    %64 = vmatprep.subr.mxu0 0.0
    %65 = vmatpush1.msra.mxu0 0.0
    %66 = vmatprep.subr.mxu0 0.0
    %67 = vmatpush1.msra.mxu0 0.0
    %68 = vmatprep.subr.mxu0 0.0
    %69 = vmatpush1.msra.mxu0 0.0
    %70 = vmatprep.subr.mxu0 0.0
    %71 = vmatpush1.msra.mxu0 0.0
    %72 = vmatprep.subr.mxu0 0.0
    %73 = vmatpush1.msra.mxu0 0.0
    %74 = vmatprep.subr.mxu0 0.0
    %75 = vmatpush1.msra.mxu0 0.0
    %76 = vmatprep.subr.mxu0 0.0
    %77 = vmatpush1.msra.mxu0 0.0
    %78 = vmatprep.subr.mxu0 0.0
    %79 = vmatpush1.msra.mxu0 0.0
    %80 = vmatprep.subr.mxu0 0.0
    %81 = vmatpush1.msra.mxu0 0.0
    %82 = vmatprep.subr.mxu0 0.0
    %83 = vmatpush1.msra.mxu0 0.0
    %84 = vmatprep.subr.mxu0 0.0
    %85 = vmatpush1.msra.mxu0 0.0
    %86 = vmatprep.subr.mxu0 0.0
    %87 = vmatpush1.msra.mxu0 0.0
    %88 = vmatprep.subr.mxu0 0.0
    %89 = vmatpush1.msra.mxu0 %v57
    %90 = vmatprep.subr.mxu0 0.0
    %91 = vmatpush1.msra.mxu0 %v56
    %92 = vmatprep.subr.mxu0 0.0
    %93 = vmatpush1.msra.mxu0 %v55
    %94 = vmatprep.subr.mxu0 0.0
    %95 = vmatpush2.msra.mxu0 0.0
    %96 = vmatprep.subr.mxu0 0.0
    %97 = vmatpush2.msra.mxu0 0.0
    %98 = vmatprep.subr.mxu0 0.0
    %99 = vmatpush2.msra.mxu0 0.0
    %100 = vmatprep.subr.mxu0 0.0
    %101 = vmatpush2.msra.mxu0 0.0
    %102 = vmatprep.subr.mxu0 0.0
    %103 = vmatpush2.msra.mxu0 0.0
    %104 = vmatprep.subr.mxu0 0.0
    %105 = vmatpush2.msra.mxu0 0.0
    %106 = vmatprep.subr.mxu0 0.0
    %107 = vmatpush2.msra.mxu0 0.0
    %108 = vmatprep.subr.mxu0 0.0
    %109 = vmatpush2.msra.mxu0 0.0
    %110 = vmatprep.subr.mxu0 0.0
    %111 = vmatpush2.msra.mxu0 0.0
    %112 = vmatprep.subr.mxu0 0.0
    %113 = vmatpush2.msra.mxu0 0.0
    %114 = vmatprep.subr.mxu0 0.0
    %115 = vmatpush2.msra.mxu0 0.0
    %116 = vmatprep.subr.mxu0 0.0
    %117 = vmatpush2.msra.mxu0 0.0
    %118 = vmatprep.subr.mxu0 0.0
    %119 = vmatpush2.msra.mxu0 0.0
    %120 = vmatprep.subr.mxu0 0.0
    %121 = vmatpush2.msra.mxu0 0.0
    %122 = vmatprep.subr.mxu0 0.0
    %123 = vmatpush2.msra.mxu0 0.0
    %124 = vmatprep.subr.mxu0 0.0
    %125 = vmatpush2.msra.mxu0 0.0
    %126 = vmatprep.mubr.f32.mxu0 0.0
    %127 = vmatmul.mubr.f32.gmra.mxu0 %v60
    %v128 = vpop.f32.mrf.mxu0
    %v129 = vadd.f32 0.0, %v128
    %v130 = vpop.f32.mrf.mxu0
    %131 = vdwg.mxu0
    %v132 = vmax.f32 %v129, 0.0
    %v133 = vld [vmem:[#allocation7] sm:$0xff]
    %v134 = vld [vmem:[#allocation7 + $0x8] sm:$0xff]
    %v135 = vld [vmem:[#allocation7 + $0x10] sm:$0xff]
    %v136 = vld [vmem:[#allocation7 + $0x18] sm:$0xff]
    %v137 = vld [vmem:[#allocation7 + $0x20] sm:$0xff]
    %v138 = vld [vmem:[#allocation7 + $0x28] sm:$0xff]
    %v139 = vld [vmem:[#allocation7 + $0x30] sm:$0xff]
    %v140 = vld [vmem:[#allocation7 + $0x38] sm:$0xff]
    %v141 = vld [vmem:[#allocation7 + $0x40] sm:$0xff]
    %v142 = vld [vmem:[#allocation7 + $0x48] sm:$0xff]
    %v143 = vld [vmem:[#allocation7 + $0x50] sm:$0xff]
    %v144 = vld [vmem:[#allocation7 + $0x58] sm:$0xff]
    %v145 = vld [vmem:[#allocation7 + $0x60] sm:$0xff]
    %v146 = vld [vmem:[#allocation7 + $0x68] sm:$0xff]
    %v147 = vld [vmem:[#allocation7 + $0x70] sm:$0xff]
    %v148 = vld [vmem:[#allocation7 + $0x78] sm:$0xff]
    %149 = vmatprep.subr.mxu0 0.0
    %150 = vmatpush1.msra.mxu0 %v148
    %151 = vmatprep.subr.mxu0 0.0
    %152 = vmatpush1.msra.mxu0 %v147
    %153 = vmatprep.subr.mxu0 0.0
    %154 = vmatpush1.msra.mxu0 %v146
    %155 = vmatprep.subr.mxu0 0.0
    %156 = vmatpush1.msra.mxu0 %v145
    %157 = vmatprep.subr.mxu0 0.0
    %158 = vmatpush1.msra.mxu0 %v144
    %159 = vmatprep.subr.mxu0 0.0
    %160 = vmatpush1.msra.mxu0 %v143
    %161 = vmatprep.subr.mxu0 0.0
    %162 = vmatpush1.msra.mxu0 %v142
    %163 = vmatprep.subr.mxu0 0.0
    %164 = vmatpush1.msra.mxu0 %v141
    %165 = vmatprep.subr.mxu0 0.0
    %166 = vmatpush1.msra.mxu0 %v140
    %167 = vmatprep.subr.mxu0 0.0
    %168 = vmatpush1.msra.mxu0 %v139
    %169 = vmatprep.subr.mxu0 0.0
    %170 = vmatpush1.msra.mxu0 %v138
    %171 = vmatprep.subr.mxu0 0.0
    %172 = vmatpush1.msra.mxu0 %v137
    %173 = vmatprep.subr.mxu0 0.0
    %174 = vmatpush1.msra.mxu0 %v136
    %175 = vmatprep.subr.mxu0 0.0
    %176 = vmatpush1.msra.mxu0 %v135
    %177 = vmatprep.subr.mxu0 0.0
    %178 = vmatpush1.msra.mxu0 %v134
    %179 = vmatprep.subr.mxu0 0.0
    %180 = vmatpush1.msra.mxu0 %v133
    %181 = vmatprep.subr.mxu0 0.0
    %182 = vmatpush2.msra.mxu0 0.0
    %183 = vmatprep.subr.mxu0 0.0
    %184 = vmatpush2.msra.mxu0 0.0
    %185 = vmatprep.subr.mxu0 0.0
    %186 = vmatpush2.msra.mxu0 0.0
    %187 = vmatprep.subr.mxu0 0.0
    %188 = vmatpush2.msra.mxu0 0.0
    %189 = vmatprep.subr.mxu0 0.0
    %190 = vmatpush2.msra.mxu0 0.0
    %191 = vmatprep.subr.mxu0 0.0
    %192 = vmatpush2.msra.mxu0 0.0
    %193 = vmatprep.subr.mxu0 0.0
    %194 = vmatpush2.msra.mxu0 0.0
    %195 = vmatprep.subr.mxu0 0.0
    %196 = vmatpush2.msra.mxu0 0.0
    %197 = vmatprep.subr.mxu0 0.0
    %198 = vmatpush2.msra.mxu0 0.0
    %199 = vmatprep.subr.mxu0 0.0
    %200 = vmatpush2.msra.mxu0 0.0
    %201 = vmatprep.subr.mxu0 0.0
    %202 = vmatpush2.msra.mxu0 0.0
    %203 = vmatprep.subr.mxu0 0.0
    %204 = vmatpush2.msra.mxu0 0.0
    %205 = vmatprep.subr.mxu0 0.0
    %206 = vmatpush2.msra.mxu0 0.0
    %207 = vmatprep.subr.mxu0 0.0
    %208 = vmatpush2.msra.mxu0 0.0
    %209 = vmatprep.subr.mxu0 0.0
    %210 = vmatpush2.msra.mxu0 0.0
    %211 = vmatprep.subr.mxu0 0.0
    %212 = vmatpush2.msra.mxu0 0.0
    %213 = vmatprep.mubr.f32.mxu0 0.0
    %214 = vmatmul.mubr.f32.gmra.mxu0 %v132
    %v215 = vpop.f32.mrf.mxu0
    %v216 = vadd.f32 0.0, %v215
    %v217 = vpop.f32.mrf.mxu0
    %218 = vdwg.mxu0
    %v219 = vmax.f32 %v216, 0.0
    %s220 = scalar_lea.vmem [#allocation7], 128
    %v221 = vld [vmem:[%s220] sm:$0xff]
    %v222 = vld [vmem:[%s220 + $0x8] sm:$0xff]
    %v223 = vld [vmem:[%s220 + $0x10] sm:$0xff]
    %v224 = vld [vmem:[%s220 + $0x18] sm:$0xff]
    %v225 = vld [vmem:[%s220 + $0x20] sm:$0xff]
    %v226 = vld [vmem:[%s220 + $0x28] sm:$0xff]
    %v227 = vld [vmem:[%s220 + $0x30] sm:$0xff]
    %v228 = vld [vmem:[%s220 + $0x38] sm:$0xff]
    %v229 = vld [vmem:[%s220 + $0x40] sm:$0xff]
    %v230 = vld [vmem:[%s220 + $0x48] sm:$0xff]
    %v231 = vld [vmem:[%s220 + $0x50] sm:$0xff]
    %v232 = vld [vmem:[%s220 + $0x58] sm:$0xff]
    %v233 = vld [vmem:[%s220 + $0x60] sm:$0xff]
    %v234 = vld [vmem:[%s220 + $0x68] sm:$0xff]
    %v235 = vld [vmem:[%s220 + $0x70] sm:$0xff]
    %v236 = vld [vmem:[%s220 + $0x78] sm:$0xff]
    %237 = vmatprep.subr.mxu0 0.0
    %238 = vmatpush1.msra.mxu0 %v236
    %239 = vmatprep.subr.mxu0 0.0
    %240 = vmatpush1.msra.mxu0 %v235
    %241 = vmatprep.subr.mxu0 0.0
    %242 = vmatpush1.msra.mxu0 %v234
    %243 = vmatprep.subr.mxu0 0.0
    %244 = vmatpush1.msra.mxu0 %v233
    %245 = vmatprep.subr.mxu0 0.0
    %246 = vmatpush1.msra.mxu0 %v232
    %247 = vmatprep.subr.mxu0 0.0
    %248 = vmatpush1.msra.mxu0 %v231
    %249 = vmatprep.subr.mxu0 0.0
    %250 = vmatpush1.msra.mxu0 %v230
    %251 = vmatprep.subr.mxu0 0.0
    %252 = vmatpush1.msra.mxu0 %v229
    %253 = vmatprep.subr.mxu0 0.0
    %254 = vmatpush1.msra.mxu0 %v228
    %255 = vmatprep.subr.mxu0 0.0
    %256 = vmatpush1.msra.mxu0 %v227
    %257 = vmatprep.subr.mxu0 0.0
    %258 = vmatpush1.msra.mxu0 %v226
    %259 = vmatprep.subr.mxu0 0.0
    %260 = vmatpush1.msra.mxu0 %v225
    %261 = vmatprep.subr.mxu0 0.0
    %262 = vmatpush1.msra.mxu0 %v224
    %263 = vmatprep.subr.mxu0 0.0
    %264 = vmatpush1.msra.mxu0 %v223
    %265 = vmatprep.subr.mxu0 0.0
    %266 = vmatpush1.msra.mxu0 %v222
    %267 = vmatprep.subr.mxu0 0.0
    %268 = vmatpush1.msra.mxu0 %v221
    %269 = vmatprep.subr.mxu0 0.0
    %270 = vmatpush2.msra.mxu0 0.0
    %271 = vmatprep.subr.mxu0 0.0
    %272 = vmatpush2.msra.mxu0 0.0
    %273 = vmatprep.subr.mxu0 0.0
    %274 = vmatpush2.msra.mxu0 0.0
    %275 = vmatprep.subr.mxu0 0.0
    %276 = vmatpush2.msra.mxu0 0.0
    %277 = vmatprep.subr.mxu0 0.0
    %278 = vmatpush2.msra.mxu0 0.0
    %279 = vmatprep.subr.mxu0 0.0
    %280 = vmatpush2.msra.mxu0 0.0
    %281 = vmatprep.subr.mxu0 0.0
    %282 = vmatpush2.msra.mxu0 0.0
    %283 = vmatprep.subr.mxu0 0.0
    %284 = vmatpush2.msra.mxu0 0.0
    %285 = vmatprep.subr.mxu0 0.0
    %286 = vmatpush2.msra.mxu0 0.0
    %287 = vmatprep.subr.mxu0 0.0
    %288 = vmatpush2.msra.mxu0 0.0
    %289 = vmatprep.subr.mxu0 0.0
    %290 = vmatpush2.msra.mxu0 0.0
    %291 = vmatprep.subr.mxu0 0.0
    %292 = vmatpush2.msra.mxu0 0.0
    %293 = vmatprep.subr.mxu0 0.0
    %294 = vmatpush2.msra.mxu0 0.0
    %295 = vmatprep.subr.mxu0 0.0
    %296 = vmatpush2.msra.mxu0 0.0
    %297 = vmatprep.subr.mxu0 0.0
    %298 = vmatpush2.msra.mxu0 0.0
    %299 = vmatprep.subr.mxu0 0.0
    %300 = vmatpush2.msra.mxu0 0.0
    %301 = vmatprep.mubr.f32.mxu0 0.0
    %302 = vmatmul.mubr.f32.gmra.mxu0 %v219
    %v303 = vpop.f32.mrf.mxu0
    %v304 = vadd.f32 0.0, %v303
    %v305 = vpop.f32.mrf.mxu0
    %306 = vdwg.mxu0
    %s307 = scalar_lea.vmem [#allocation7], 256
    %v308 = vld [vmem:[%s307] sm:$0xff]
    %v309 = vld [vmem:[%s307 + $0x8] sm:$0xff]
    %v310 = vld [vmem:[%s307 + $0x10] sm:$0xff]
    %v311 = vld [vmem:[%s307 + $0x18] sm:$0xff]
    %v312 = vld [vmem:[%s307 + $0x20] sm:$0xff]
    %v313 = vld [vmem:[%s307 + $0x28] sm:$0xff]
    %v314 = vld [vmem:[%s307 + $0x30] sm:$0xff]
    %v315 = vld [vmem:[%s307 + $0x38] sm:$0xff]
    %v316 = vld [vmem:[%s307 + $0x40] sm:$0xff]
    %v317 = vld [vmem:[%s307 + $0x48] sm:$0xff]
    %v318 = vld [vmem:[%s307 + $0x50] sm:$0xff]
    %v319 = vld [vmem:[%s307 + $0x58] sm:$0xff]
    %v320 = vld [vmem:[%s307 + $0x60] sm:$0xff]
    %v321 = vld [vmem:[%s307 + $0x68] sm:$0xff]
    %v322 = vld [vmem:[%s307 + $0x70] sm:$0xff]
    %v323 = vld [vmem:[%s307 + $0x78] sm:$0xff]
    %324 = vmatprep.subr.mxu0 0.0
    %325 = vmatpush1.msra.mxu0 %v323
    %326 = vmatprep.subr.mxu0 0.0
    %327 = vmatpush1.msra.mxu0 %v322
    %328 = vmatprep.subr.mxu0 0.0
    %329 = vmatpush1.msra.mxu0 %v321
    %330 = vmatprep.subr.mxu0 0.0
    %331 = vmatpush1.msra.mxu0 %v320
    %332 = vmatprep.subr.mxu0 0.0
    %333 = vmatpush1.msra.mxu0 %v319
    %334 = vmatprep.subr.mxu0 0.0
    %335 = vmatpush1.msra.mxu0 %v318
    %336 = vmatprep.subr.mxu0 0.0
    %337 = vmatpush1.msra.mxu0 %v317
    %338 = vmatprep.subr.mxu0 0.0
    %339 = vmatpush1.msra.mxu0 %v316
    %340 = vmatprep.subr.mxu0 0.0
    %341 = vmatpush1.msra.mxu0 %v315
    %342 = vmatprep.subr.mxu0 0.0
    %343 = vmatpush1.msra.mxu0 %v314
    %344 = vmatprep.subr.mxu0 0.0
    %345 = vmatpush1.msra.mxu0 %v313
    %346 = vmatprep.subr.mxu0 0.0
    %347 = vmatpush1.msra.mxu0 %v312
    %348 = vmatprep.subr.mxu0 0.0
    %349 = vmatpush1.msra.mxu0 %v311
    %350 = vmatprep.subr.mxu0 0.0
    %351 = vmatpush1.msra.mxu0 %v310
    %352 = vmatprep.subr.mxu0 0.0
    %353 = vmatpush1.msra.mxu0 %v309
    %354 = vmatprep.subr.mxu0 0.0
    %355 = vmatpush1.msra.mxu0 %v308
    %356 = vmatprep.subr.mxu0 0.0
    %357 = vmatpush2.msra.mxu0 0.0
    %358 = vmatprep.subr.mxu0 0.0
    %359 = vmatpush2.msra.mxu0 0.0
    %360 = vmatprep.subr.mxu0 0.0
    %361 = vmatpush2.msra.mxu0 0.0
    %362 = vmatprep.subr.mxu0 0.0
    %363 = vmatpush2.msra.mxu0 0.0
    %364 = vmatprep.subr.mxu0 0.0
    %365 = vmatpush2.msra.mxu0 0.0
    %366 = vmatprep.subr.mxu0 0.0
    %367 = vmatpush2.msra.mxu0 0.0
    %368 = vmatprep.subr.mxu0 0.0
    %369 = vmatpush2.msra.mxu0 0.0
    %370 = vmatprep.subr.mxu0 0.0
    %371 = vmatpush2.msra.mxu0 0.0
    %372 = vmatprep.subr.mxu0 0.0
    %373 = vmatpush2.msra.mxu0 0.0
    %374 = vmatprep.subr.mxu0 0.0
    %375 = vmatpush2.msra.mxu0 0.0
    %376 = vmatprep.subr.mxu0 0.0
    %377 = vmatpush2.msra.mxu0 0.0
    %378 = vmatprep.subr.mxu0 0.0
    %379 = vmatpush2.msra.mxu0 0.0
    %380 = vmatprep.subr.mxu0 0.0
    %381 = vmatpush2.msra.mxu0 0.0
    %382 = vmatprep.subr.mxu0 0.0
    %383 = vmatpush2.msra.mxu0 0.0
    %384 = vmatprep.subr.mxu0 0.0
    %385 = vmatpush2.msra.mxu0 0.0
    %386 = vmatprep.subr.mxu0 0.0
    %387 = vmatpush2.msra.mxu0 0.0
    %388 = vmatprep.mubr.f32.mxu0 0.0
    %389 = vmatmul.mubr.f32.gmra.mxu0 %v304
    %v390 = vpop.f32.mrf.mxu0
    %v391 = vadd.f32 0.0, %v390
    %v392 = vpop.f32.mrf.mxu0
    %393 = vdwg.mxu0
    %v394 = vmax.f32 %v391, 0.0
    %s395 = scalar_lea.vmem [#allocation7], 384
    %v396 = vld [vmem:[%s395] sm:$0xff]
    %v397 = vld [vmem:[%s395 + $0x8] sm:$0xff]
    %v398 = vld [vmem:[%s395 + $0x10] sm:$0xff]
    %v399 = vld [vmem:[%s395 + $0x18] sm:$0xff]
    %v400 = vld [vmem:[%s395 + $0x20] sm:$0xff]
    %v401 = vld [vmem:[%s395 + $0x28] sm:$0xff]
    %v402 = vld [vmem:[%s395 + $0x30] sm:$0xff]
    %v403 = vld [vmem:[%s395 + $0x38] sm:$0xff]
    %v404 = vld [vmem:[%s395 + $0x40] sm:$0xff]
    %v405 = vld [vmem:[%s395 + $0x48] sm:$0xff]
    %v406 = vld [vmem:[%s395 + $0x50] sm:$0xff]
    %v407 = vld [vmem:[%s395 + $0x58] sm:$0xff]
    %v408 = vld [vmem:[%s395 + $0x60] sm:$0xff]
    %v409 = vld [vmem:[%s395 + $0x68] sm:$0xff]
    %v410 = vld [vmem:[%s395 + $0x70] sm:$0xff]
    %v411 = vld [vmem:[%s395 + $0x78] sm:$0xff]
    %412 = vmatprep.subr.mxu0 0.0
    %413 = vmatpush1.msra.mxu0 %v411
    %414 = vmatprep.subr.mxu0 0.0
    %415 = vmatpush1.msra.mxu0 %v410
    %416 = vmatprep.subr.mxu0 0.0
    %417 = vmatpush1.msra.mxu0 %v409
    %418 = vmatprep.subr.mxu0 0.0
    %419 = vmatpush1.msra.mxu0 %v408
    %420 = vmatprep.subr.mxu0 0.0
    %421 = vmatpush1.msra.mxu0 %v407
    %422 = vmatprep.subr.mxu0 0.0
    %423 = vmatpush1.msra.mxu0 %v406
    %424 = vmatprep.subr.mxu0 0.0
    %425 = vmatpush1.msra.mxu0 %v405
    %426 = vmatprep.subr.mxu0 0.0
    %427 = vmatpush1.msra.mxu0 %v404
    %428 = vmatprep.subr.mxu0 0.0
    %429 = vmatpush1.msra.mxu0 %v403
    %430 = vmatprep.subr.mxu0 0.0
    %431 = vmatpush1.msra.mxu0 %v402
    %432 = vmatprep.subr.mxu0 0.0
    %433 = vmatpush1.msra.mxu0 %v401
    %434 = vmatprep.subr.mxu0 0.0
    %435 = vmatpush1.msra.mxu0 %v400
    %436 = vmatprep.subr.mxu0 0.0
    %437 = vmatpush1.msra.mxu0 %v399
    %438 = vmatprep.subr.mxu0 0.0
    %439 = vmatpush1.msra.mxu0 %v398
    %440 = vmatprep.subr.mxu0 0.0
    %441 = vmatpush1.msra.mxu0 %v397
    %442 = vmatprep.subr.mxu0 0.0
    %443 = vmatpush1.msra.mxu0 %v396
    %444 = vmatprep.subr.mxu0 0.0
    %445 = vmatpush2.msra.mxu0 0.0
    %446 = vmatprep.subr.mxu0 0.0
    %447 = vmatpush2.msra.mxu0 0.0
    %448 = vmatprep.subr.mxu0 0.0
    %449 = vmatpush2.msra.mxu0 0.0
    %450 = vmatprep.subr.mxu0 0.0
    %451 = vmatpush2.msra.mxu0 0.0
    %452 = vmatprep.subr.mxu0 0.0
    %453 = vmatpush2.msra.mxu0 0.0
    %454 = vmatprep.subr.mxu0 0.0
    %455 = vmatpush2.msra.mxu0 0.0
    %456 = vmatprep.subr.mxu0 0.0
    %457 = vmatpush2.msra.mxu0 0.0
    %458 = vmatprep.subr.mxu0 0.0
    %459 = vmatpush2.msra.mxu0 0.0
    %460 = vmatprep.subr.mxu0 0.0
    %461 = vmatpush2.msra.mxu0 0.0
    %462 = vmatprep.subr.mxu0 0.0
    %463 = vmatpush2.msra.mxu0 0.0
    %464 = vmatprep.subr.mxu0 0.0
    %465 = vmatpush2.msra.mxu0 0.0
    %466 = vmatprep.subr.mxu0 0.0
    %467 = vmatpush2.msra.mxu0 0.0
    %468 = vmatprep.subr.mxu0 0.0
    %469 = vmatpush2.msra.mxu0 0.0
    %470 = vmatprep.subr.mxu0 0.0
    %471 = vmatpush2.msra.mxu0 0.0
    %472 = vmatprep.subr.mxu0 0.0
    %473 = vmatpush2.msra.mxu0 0.0
    %474 = vmatprep.subr.mxu0 0.0
    %475 = vmatpush2.msra.mxu0 0.0
    %476 = vmatprep.mubr.f32.mxu0 0.0
    %477 = vmatmul.mubr.f32.gmra.mxu0 %v394
    %v478 = vpop.f32.mrf.mxu0
    %v479 = vadd.f32 0.0, %v478
    %v480 = vpop.f32.mrf.mxu0
    %481 = vdwg.mxu0
    %v482 = vmax.f32 %v479, 0.0
    %s483 = scalar_lea.vmem [#allocation7], 512
    %v484 = vld [vmem:[%s483] sm:$0xff]
    %v485 = vld [vmem:[%s483 + $0x8] sm:$0xff]
    %v486 = vld [vmem:[%s483 + $0x10] sm:$0xff]
    %v487 = vld [vmem:[%s483 + $0x18] sm:$0xff]
    %v488 = vld [vmem:[%s483 + $0x20] sm:$0xff]
    %v489 = vld [vmem:[%s483 + $0x28] sm:$0xff]
    %v490 = vld [vmem:[%s483 + $0x30] sm:$0xff]
    %v491 = vld [vmem:[%s483 + $0x38] sm:$0xff]
    %v492 = vld [vmem:[%s483 + $0x40] sm:$0xff]
    %v493 = vld [vmem:[%s483 + $0x48] sm:$0xff]
    %v494 = vld [vmem:[%s483 + $0x50] sm:$0xff]
    %v495 = vld [vmem:[%s483 + $0x58] sm:$0xff]
    %v496 = vld [vmem:[%s483 + $0x60] sm:$0xff]
    %v497 = vld [vmem:[%s483 + $0x68] sm:$0xff]
    %v498 = vld [vmem:[%s483 + $0x70] sm:$0xff]
    %v499 = vld [vmem:[%s483 + $0x78] sm:$0xff]
    %500 = vmatprep.subr.mxu0 0.0
    %501 = vmatpush1.msra.mxu0 %v499
    %502 = vmatprep.subr.mxu0 0.0
    %503 = vmatpush1.msra.mxu0 %v498
    %504 = vmatprep.subr.mxu0 0.0
    %505 = vmatpush1.msra.mxu0 %v497
    %506 = vmatprep.subr.mxu0 0.0
    %507 = vmatpush1.msra.mxu0 %v496
    %508 = vmatprep.subr.mxu0 0.0
    %509 = vmatpush1.msra.mxu0 %v495
    %510 = vmatprep.subr.mxu0 0.0
    %511 = vmatpush1.msra.mxu0 %v494
    %512 = vmatprep.subr.mxu0 0.0
    %513 = vmatpush1.msra.mxu0 %v493
    %514 = vmatprep.subr.mxu0 0.0
    %515 = vmatpush1.msra.mxu0 %v492
    %516 = vmatprep.subr.mxu0 0.0
    %517 = vmatpush1.msra.mxu0 %v491
    %518 = vmatprep.subr.mxu0 0.0
    %519 = vmatpush1.msra.mxu0 %v490
    %520 = vmatprep.subr.mxu0 0.0
    %521 = vmatpush1.msra.mxu0 %v489
    %522 = vmatprep.subr.mxu0 0.0
    %523 = vmatpush1.msra.mxu0 %v488
    %524 = vmatprep.subr.mxu0 0.0
    %525 = vmatpush1.msra.mxu0 %v487
    %526 = vmatprep.subr.mxu0 0.0
    %527 = vmatpush1.msra.mxu0 %v486
    %528 = vmatprep.subr.mxu0 0.0
    %529 = vmatpush1.msra.mxu0 %v485
    %530 = vmatprep.subr.mxu0 0.0
    %531 = vmatpush1.msra.mxu0 %v484
    %532 = vmatprep.subr.mxu0 0.0
    %533 = vmatpush2.msra.mxu0 0.0
    %534 = vmatprep.subr.mxu0 0.0
    %535 = vmatpush2.msra.mxu0 0.0
    %536 = vmatprep.subr.mxu0 0.0
    %537 = vmatpush2.msra.mxu0 0.0
    %538 = vmatprep.subr.mxu0 0.0
    %539 = vmatpush2.msra.mxu0 0.0
    %540 = vmatprep.subr.mxu0 0.0
    %541 = vmatpush2.msra.mxu0 0.0
    %542 = vmatprep.subr.mxu0 0.0
    %543 = vmatpush2.msra.mxu0 0.0
    %544 = vmatprep.subr.mxu0 0.0
    %545 = vmatpush2.msra.mxu0 0.0
    %546 = vmatprep.subr.mxu0 0.0
    %547 = vmatpush2.msra.mxu0 0.0
    %548 = vmatprep.subr.mxu0 0.0
    %549 = vmatpush2.msra.mxu0 0.0
    %550 = vmatprep.subr.mxu0 0.0
    %551 = vmatpush2.msra.mxu0 0.0
    %552 = vmatprep.subr.mxu0 0.0
    %553 = vmatpush2.msra.mxu0 0.0
    %554 = vmatprep.subr.mxu0 0.0
    %555 = vmatpush2.msra.mxu0 0.0
    %556 = vmatprep.subr.mxu0 0.0
    %557 = vmatpush2.msra.mxu0 0.0
    %558 = vmatprep.subr.mxu0 0.0
    %559 = vmatpush2.msra.mxu0 0.0
    %560 = vmatprep.subr.mxu0 0.0
    %561 = vmatpush2.msra.mxu0 0.0
    %562 = vmatprep.subr.mxu0 0.0
    %563 = vmatpush2.msra.mxu0 0.0
    %564 = vmatprep.mubr.f32.mxu0 0.0
    %565 = vmatmul.mubr.f32.gmra.mxu0 %v482
    %v566 = vpop.f32.mrf.mxu0
    %v567 = vadd.f32 0.0, %v566
    %v568 = vpop.f32.mrf.mxu0
    %569 = vdwg.mxu0
    %v570 = vmax.f32 %v567, 0.0
    %s571 = scalar_lea.vmem [#allocation7], 640
    %v572 = vld [vmem:[%s571] sm:$0xff]
    %v573 = vld [vmem:[%s571 + $0x8] sm:$0xff]
    %v574 = vld [vmem:[%s571 + $0x10] sm:$0xff]
    %v575 = vld [vmem:[%s571 + $0x18] sm:$0xff]
    %v576 = vld [vmem:[%s571 + $0x20] sm:$0xff]
    %v577 = vld [vmem:[%s571 + $0x28] sm:$0xff]
    %v578 = vld [vmem:[%s571 + $0x30] sm:$0xff]
    %v579 = vld [vmem:[%s571 + $0x38] sm:$0xff]
    %v580 = vld [vmem:[%s571 + $0x40] sm:$0xff]
    %v581 = vld [vmem:[%s571 + $0x48] sm:$0xff]
    %v582 = vld [vmem:[%s571 + $0x50] sm:$0xff]
    %v583 = vld [vmem:[%s571 + $0x58] sm:$0xff]
    %v584 = vld [vmem:[%s571 + $0x60] sm:$0xff]
    %v585 = vld [vmem:[%s571 + $0x68] sm:$0xff]
    %v586 = vld [vmem:[%s571 + $0x70] sm:$0xff]
    %v587 = vld [vmem:[%s571 + $0x78] sm:$0xff]
    %v588 = vlaneseq
    %v589 = vand.u32 %v588, 127
    %vm590 = vcmp.lt.s32.totalorder %v589, 8
    %v591 = vsel %vm590, %v304, 0.0
    %592 = vmatprep.subr.mxu0 0.0
    %593 = vmatpush1.msra.mxu0 %v587
    %594 = vmatprep.subr.mxu0 0.0
    %595 = vmatpush1.msra.mxu0 %v586
    %596 = vmatprep.subr.mxu0 0.0
    %597 = vmatpush1.msra.mxu0 %v585
    %598 = vmatprep.subr.mxu0 0.0
    %599 = vmatpush1.msra.mxu0 %v584
    %600 = vmatprep.subr.mxu0 0.0
    %601 = vmatpush1.msra.mxu0 %v583
    %602 = vmatprep.subr.mxu0 0.0
    %603 = vmatpush1.msra.mxu0 %v582
    %604 = vmatprep.subr.mxu0 0.0
    %605 = vmatpush1.msra.mxu0 %v581
    %606 = vmatprep.subr.mxu0 0.0
    %607 = vmatpush1.msra.mxu0 %v580
    %608 = vmatprep.subr.mxu0 0.0
    %609 = vmatpush1.msra.mxu0 %v579
    %610 = vmatprep.subr.mxu0 0.0
    %611 = vmatpush1.msra.mxu0 %v578
    %612 = vmatprep.subr.mxu0 0.0
    %613 = vmatpush1.msra.mxu0 %v577
    %614 = vmatprep.subr.mxu0 0.0
    %615 = vmatpush1.msra.mxu0 %v576
    %616 = vmatprep.subr.mxu0 0.0
    %617 = vmatpush1.msra.mxu0 %v575
    %618 = vmatprep.subr.mxu0 0.0
    %619 = vmatpush1.msra.mxu0 %v574
    %620 = vmatprep.subr.mxu0 0.0
    %621 = vmatpush1.msra.mxu0 %v573
    %622 = vmatprep.subr.mxu0 0.0
    %623 = vmatpush1.msra.mxu0 %v572
    %624 = vmatprep.subr.mxu0 0.0
    %625 = vmatpush2.msra.mxu0 0.0
    %626 = vmatprep.subr.mxu0 0.0
    %627 = vmatpush2.msra.mxu0 0.0
    %628 = vmatprep.subr.mxu0 0.0
    %629 = vmatpush2.msra.mxu0 0.0
    %630 = vmatprep.subr.mxu0 0.0
    %631 = vmatpush2.msra.mxu0 0.0
    %632 = vmatprep.subr.mxu0 0.0
    %633 = vmatpush2.msra.mxu0 0.0
    %634 = vmatprep.subr.mxu0 0.0
    %635 = vmatpush2.msra.mxu0 0.0
    %636 = vmatprep.subr.mxu0 0.0
    %637 = vmatpush2.msra.mxu0 0.0
    %638 = vmatprep.subr.mxu0 0.0
    %639 = vmatpush2.msra.mxu0 0.0
    %640 = vmatprep.subr.mxu0 0.0
    %641 = vmatpush2.msra.mxu0 0.0
    %642 = vmatprep.subr.mxu0 0.0
    %643 = vmatpush2.msra.mxu0 0.0
    %644 = vmatprep.subr.mxu0 0.0
    %645 = vmatpush2.msra.mxu0 0.0
    %646 = vmatprep.subr.mxu0 0.0
    %647 = vmatpush2.msra.mxu0 0.0
    %648 = vmatprep.subr.mxu0 0.0
    %649 = vmatpush2.msra.mxu0 0.0
    %650 = vmatprep.subr.mxu0 0.0
    %651 = vmatpush2.msra.mxu0 0.0
    %652 = vmatprep.subr.mxu0 0.0
    %653 = vmatpush2.msra.mxu0 0.0
    %654 = vmatprep.subr.mxu0 0.0
    %655 = vmatpush2.msra.mxu0 0.0
    %656 = vmatprep.mubr.f32.mxu0 0.0
    %657 = vmatmul.mubr.f32.gmra.mxu0 %v570
    %v658 = vpop.f32.mrf.mxu0
    %v659 = vadd.f32 %v591, %v658
    %v660 = vpop.f32.mrf.mxu0
    %661 = vdwg.mxu0
    %662 = vst [vmem:[#allocation8] sm:$0xff] %v659
    // Predicated region
    $region26: #{tpu_custom_call.1} parent=1 // pred_check
      _
    $region27: #{tpu_custom_call.1} parent=1 // pred_check_branch
      %664 = sbr.rel (0) target = $region29
    $region28: #{tpu_custom_call.1} parent=1 // pred_region
      %s666 = ssub.s32 128, 128
      %667 = vsyncadd [#allocation4], %s666
      %s669 = sshll.u32 [#allocation8], 4
      %s670 = int_to_ptr.vmem [resolvable:$true] %s669
      %672 = dma.vmem_to_hbm [thread:$0]  %s670, 128, %s3, [#allocation4]
    $region29: #{tpu_custom_call.1} parent=1 // pred_fallthru
      _
    // Predicated region
    $region30: #{tpu_custom_call.1} parent=1 // pred_check
      _
    $region31: #{tpu_custom_call.1} parent=1 // pred_check_branch
      %674 = sbr.rel (0) target = $region33
    $region32: #{tpu_custom_call.1} parent=1 // pred_region
      %675 = dma.done [#allocation4], 128
    $region33: #{tpu_custom_call.1} parent=1 // pred_fallthru
      _
    %676 = vsyncpa [#allocation3], 1
    %677 = vsyncpa [#allocation6], 1
    %678 = vsyncpa [#allocation4], 1

</llo_original>
